<compile_context>
chip_gen: v7x
topology: tpu7x:2x2x1
jax: 0.10.0
libtpu: 0.0.40
codegen_flags: <defaults>
</compile_context>

<pallas_src>
import functools
from typing import NamedTuple, Optional

import jax
import jax.numpy as jnp
from jax.experimental import pallas as pl
from jax.experimental.pallas import tpu as pltpu

EPS = 1e-5  # nn.LayerNorm default


def _round_up(x, m):
    return (x + m - 1) // m * m


def _vmem_cap_bytes():
    """Generation-aware VMEM cap (leave headroom for compiler scratch)."""
    try:
        cap = int(0.75 * pltpu.get_tpu_info().vmem_capacity_bytes)
    except Exception:
        cap = 48 * 1024 * 1024  # safe on every generation (v7x: 64 MiB / TC)
    return max(cap, 16 * 1024 * 1024)


def _vmem_budget(tm, tn, d_pad, x_bytes, out_bytes, n_cols):
    """Estimate real VMEM usage: pipeline buffers + in-kernel temporaries."""
    w_bufs = 1 if n_cols == 1 else 2          # Buffered(1) when W is constant
    pipeline = (
        2 * tm * d_pad * x_bytes              # x tile, double-buffered
        + w_bufs * d_pad * tn * 2             # bf16 folded-W tile
        + w_bufs * 8 * tn * 4                 # f32 bias row (sublane-padded)
        + 2 * tm * tn * out_bytes             # output tile, double-buffered
        + tm * d_pad * 2                      # bf16 xn scratch (persistent)
    )
    temps = (
        2 * tm * d_pad * 4                    # f32 x / centered-x inside LN
        + tm * tn * 4                         # f32 matmul accumulator
    )
    return pipeline + temps


# --------------------------------------------------------------------------
# Kernel: one (tm, tn) output tile.  LayerNorm once per row tile (j == 0),
# bf16 MXU matmul with f32 accumulation for every column tile.
# --------------------------------------------------------------------------
def prenorm_linear_kernel(x_ref, w_ref, bias_ref, o_ref, xn_ref, *, d_true):
    j = pl.program_id(1)

    @pl.when(j == 0)
    def _():
        x = x_ref[...].astype(jnp.float32)                       # (tm, d_pad)
        inv_d = jnp.float32(1.0 / d_true)
        # Padded feature columns are zero, so the plain sum / d_true is the
        # exact mean over the true feature width.
        mean = jnp.sum(x, axis=-1, keepdims=True) * inv_d
        xc = x - mean
        if x_ref.shape[-1] != d_true:
            # Zero the padded columns so (a) the two-pass variance is exact and
            # (b) they contribute exactly nothing to the matmul.
            col = jax.lax.broadcasted_iota(jnp.int32, x.shape, 1)
            xc = jnp.where(col < d_true, xc, 0.0)
        var = jnp.sum(xc * xc, axis=-1, keepdims=True) * inv_d
        xn_ref[...] = (xc * jax.lax.rsqrt(var + EPS)).astype(jnp.bfloat16)

    # LN affine (gamma/beta) is folded into W'/b' at weight-prep time.
    out = jnp.dot(xn_ref[...], w_ref[...], preferred_element_type=jnp.float32)
    o_ref[...] = (out + bias_ref[...]).astype(o_ref.dtype)


# --------------------------------------------------------------------------
# One-time weight preparation (run once per model, NOT per forward call).
# --------------------------------------------------------------------------
class PreNormLinearParams(NamedTuple):
    w2: jax.Array       # (d_pad, dout_pad) bf16, gamma folded in
    b2: jax.Array       # (1, dout_pad) f32, beta @ W + bias folded in
    d: int
    dout: int
    d_pad: int
    dout_pad: int
    tm: int
    tn: int


def prepare_prenorm_linear(gamma, beta, w, bias, *, tm=256, tn=None):
    """Fold the LayerNorm affine into the linear and pad/cast the weights.

    W' = gamma[:, None] * W  (bf16),  b' = beta @ W + bias  (f32).
    """
    D, Dout = w.shape
    w_f = gamma.astype(jnp.float32)[:, None] * w.astype(jnp.float32)
    b_f = beta.astype(jnp.float32) @ w.astype(jnp.float32) + bias.astype(jnp.float32)

    d_pad = _round_up(D, 128)
    cap = _vmem_cap_bytes()
    if tn is None:
        # Largest column tile whose (conservative f32-IO) budget fits VMEM, so
        # n_cols -> 1 whenever possible and the weight slab is read once.
        tn = _round_up(Dout, 128)
        while tn > 512 and _vmem_budget(tm, tn, d_pad, 4, 4,
                                        pl.cdiv(Dout, tn)) > cap:
            tn = _round_up((tn + 1) // 2, 128)
    else:
        tn = min(tn, _round_up(Dout, 128))
    dout_pad = _round_up(Dout, tn)

    w2 = jnp.pad(w_f, ((0, d_pad - D), (0, dout_pad - Dout))).astype(jnp.bfloat16)
    b2 = jnp.pad(b_f, (0, dout_pad - Dout)).reshape(1, dout_pad)
    return PreNormLinearParams(w2, b2, D, Dout, d_pad, dout_pad, tm, tn)


# --------------------------------------------------------------------------
# Forward: x (B, S, D) -> (B, S, Dout)
# --------------------------------------------------------------------------
def prenorm_linear_apply(params: PreNormLinearParams, x,
                         *, out_dtype: Optional[jnp.dtype] = None):
    B, S, D = x.shape
    assert D == params.d, "feature dim mismatch with prepared weights"
    out_dtype = x.dtype if out_dtype is None else out_dtype

    M = B * S
    # Shrink the row tile for small M so row padding is (nearly) a no-op;
    # keep it a multiple of 16 for bf16 sublane packing of the xn scratch.
    tm = min(params.tm, _round_up(M, 16))
    tn = params.tn
    d_pad, dout_pad = params.d_pad, params.dout_pad
    m_pad = _round_up(M, tm)
    n_rows = m_pad // tm
    n_cols = dout_pad // tn

    x2 = x.reshape(M, D)
    if m_pad != M or d_pad != D:
        x2 = jnp.pad(x2, ((0, m_pad - M), (0, d_pad - D)))

    x_bytes = x2.dtype.itemsize
    out_bytes = jnp.dtype(out_dtype).itemsize
    cap = _vmem_cap_bytes()
    budget = _vmem_budget(tm, tn, d_pad, x_bytes, out_bytes, n_cols)
    vmem_limit = int(min(cap, max(2 * budget, 32 * 1024 * 1024)))

    kernel = functools.partial(prenorm_linear_kernel, d_true=D)
    out_shape = jax.ShapeDtypeStruct((m_pad, dout_pad), out_dtype)

    def build(single_buffer_w):
        w_kwargs = {}
        if single_buffer_w:
            # W / bias block indices are constant across the whole grid when
            # n_cols == 1 -> double-buffering them only wastes a full slab.
            w_kwargs = dict(pipeline_mode=pl.Buffered(buffer_count=1))
        return pl.pallas_call(
            kernel,
            out_shape=out_shape,
            grid_spec=pltpu.PrefetchScalarGridSpec(
                num_scalar_prefetch=0,
                # rows (i) outer, weight columns (j) inner: x tile and the bf16
                # xn scratch stay resident across the inner j loop, LayerNorm
                # runs once per row tile, and when n_cols == 1 the weight slab
                # is fetched exactly once.
                grid=(n_rows, n_cols),
                in_specs=[
                    pl.BlockSpec((tm, d_pad), lambda i, j: (i, 0)),   # x rows
                    pl.BlockSpec((d_pad, tn), lambda i, j: (0, j),    # W' bf16
                                 **w_kwargs),
                    pl.BlockSpec((1, tn), lambda i, j: (0, j),        # b' f32
                                 **w_kwargs),
                ],
                out_specs=pl.BlockSpec((tm, tn), lambda i, j: (i, j)),
                scratch_shapes=[pltpu.VMEM((tm, d_pad), jnp.bfloat16)],
            ),
            compiler_params=pltpu.CompilerParams(
                # j carries a dependency through the xn scratch -> "arbitrary";
                # row tiles are independent -> "parallel" (megacore).
                dimension_semantics=("parallel", "arbitrary"),
                vmem_limit_bytes=vmem_limit,
            ),
        )

    if n_cols == 1:
        try:
            out2 = build(True)(x2, params.w2, params.b2)
        except Exception:
            # Fallback if this JAX build does not accept pipeline_mode /
            # Buffered(1) on the TPU pallas_call pipeline.
            out2 = build(False)(x2, params.w2, params.b2)
    else:
        out2 = build(False)(x2, params.w2, params.b2)

    return out2[:M, :params.dout].reshape(B, S, params.dout)


def prenorm_linear(x, gamma, beta, w, bias, *, tm=256, tn=None, out_dtype=None):
    """Convenience one-shot wrapper (prep + apply). Prefer prepare+apply in a
    model so the weight prep is amortized across forward calls."""
    params = prepare_prenorm_linear(gamma, beta, w, bias, tm=tm, tn=tn)
    return prenorm_linear_apply(params, x, out_dtype=out_dtype)


def prenorm_linear_ref(x, gamma, beta, w, bias):
    """Pure-JAX f32 reference matching PyTorch LayerNorm + Linear semantics."""
    xf = x.astype(jnp.float32)
    mean = jnp.mean(xf, axis=-1, keepdims=True)
    var = jnp.mean((xf - mean) ** 2, axis=-1, keepdims=True)
    xn = (xf - mean) * jax.lax.rsqrt(var + EPS)
    y = xn * gamma + beta
    return (y @ w + bias).astype(x.dtype)


if __name__ == "__main__":
    B, S, D = 2, 8, 32   # batch=2, seq=8, hidden=32
    Dout = D

    key = jax.random.PRNGKey(0)
    kx, kw, kb, kg, kbe = jax.random.split(key, 5)

    x = jax.random.normal(kx, (B, S, D), dtype=jnp.float32)

    # LayerNorm params (perturbed from default init to exercise the affine fold)
    gamma = 1.0 + 0.1 * jax.random.normal(kg, (D,), dtype=jnp.float32)
    beta = 0.1 * jax.random.normal(kbe, (D,), dtype=jnp.float32)

    # fn = Linear(D, Dout): uniform init like nn.Linear
    bound = 1.0 / (D ** 0.5)
    w = jax.random.uniform(kw, (D, Dout), minval=-bound, maxval=bound,
                           dtype=jnp.float32)
    bias = jax.random.uniform(kb, (Dout,), minval=-bound, maxval=bound,
                              dtype=jnp.float32)

    # Weight prep (fold / pad / bf16 cast) runs ONCE; apply runs per forward.
    params = prepare_prenorm_linear(gamma, beta, w, bias)
    out = prenorm_linear_apply(params, x)
    out = jax.block_until_ready(out)

    ref = prenorm_linear_ref(x, gamma, beta, w, bias)
    assert out.shape == (B, S, Dout)
    # bf16 MXU operands with f32 accumulation -> loose tolerance vs f32 ref
    assert jnp.allclose(out, ref, atol=2e-2, rtol=2e-2), "mismatch vs reference"

    print("KERNEL_OK")
</pallas_src>

<mosaic_0001>
module attributes {stable_mosaic.version = 11 : i64} {
  func.func @prenorm_linear_kernel(%arg0: i32, %arg1: i32, %arg2: memref<16x128xf32, #tpu.memory_space<vmem>>, %arg3: memref<128x128xbf16, #tpu.memory_space<vmem>>, %arg4: memref<1x128xf32, #tpu.memory_space<vmem>>, %arg5: memref<16x128xf32, #tpu.memory_space<vmem>>, %arg6: memref<16x128xbf16, #tpu.memory_space<vmem>>) attributes {dimension_semantics = [#tpu.dimension_semantics<parallel>, #tpu.dimension_semantics<arbitrary>], iteration_bounds = array<i64: 1, 1>, scalar_prefetch = 0 : i64, scratch_operands = 1 : i64, tpu.core_type = #tpu.core_type<tc>, window_params = [{transform_indices = @transform_0, window_bounds = array<i64: 16, 128>}, {pipeline_mode = #tpu.pipeline_mode<synchronous>, transform_indices = @transform_1, window_bounds = array<i64: 128, 128>}, {pipeline_mode = #tpu.pipeline_mode<synchronous>, transform_indices = @transform_2, window_bounds = array<i64: 1, 128>}, {transform_indices = @transform_3, window_bounds = array<i64: 16, 128>}]} {
    %c0_i32 = arith.constant 0 : i32
    %0 = arith.cmpi eq, %arg1, %c0_i32 : i32
    %1 = arith.extui %0 : i1 to i32
    %c0_i32_0 = arith.constant 0 : i32
    %2 = arith.cmpi ne, %1, %c0_i32_0 : i32
    scf.if %2 {
      %c0_8 = arith.constant 0 : index
      %c0_9 = arith.constant 0 : index
      %10 = vector.load %arg2[%c0_8, %c0_9] : memref<16x128xf32, #tpu.memory_space<vmem>>, vector<16x128xf32>
      %cst_10 = arith.constant dense<0.000000e+00> : vector<16xf32>
      %11 = vector.multi_reduction <add>, %10, %cst_10 [1] : vector<16x128xf32> to vector<16xf32>
      %12 = vector.shape_cast %11 : vector<16xf32> to vector<16x1xf32>
      %cst_11 = arith.constant 3.125000e-02 : f32
      %13 = vector.broadcast %cst_11 : f32 to vector<16x1xf32>
      %14 = arith.mulf %12, %13 : vector<16x1xf32>
      %15 = vector.broadcast %14 : vector<16x1xf32> to vector<16x128xf32>
      %16 = arith.subf %10, %15 : vector<16x128xf32>
      %17 = tpu.iota {dimensions = array<i32: 1>} : vector<16x128xi32>
      %c32_i32 = arith.constant 32 : i32
      %18 = vector.broadcast %c32_i32 : i32 to vector<16x128xi32>
      %19 = arith.cmpi slt, %17, %18 : vector<16x128xi32>
      %cst_12 = arith.constant 0.000000e+00 : f32
      %20 = vector.broadcast %cst_12 : f32 to vector<16x128xf32>
      %21 = arith.select %19, %16, %20 : vector<16x128xi1>, vector<16x128xf32>
      %22 = arith.mulf %21, %21 : vector<16x128xf32>
      %cst_13 = arith.constant dense<0.000000e+00> : vector<16xf32>
      %23 = vector.multi_reduction <add>, %22, %cst_13 [1] : vector<16x128xf32> to vector<16xf32>
      %24 = vector.shape_cast %23 : vector<16xf32> to vector<16x1xf32>
      %cst_14 = arith.constant 3.125000e-02 : f32
      %25 = vector.broadcast %cst_14 : f32 to vector<16x1xf32>
      %26 = arith.mulf %24, %25 : vector<16x1xf32>
      %cst_15 = arith.constant 9.99999974E-6 : f32
      %27 = vector.broadcast %cst_15 : f32 to vector<16x1xf32>
      %28 = arith.addf %26, %27 : vector<16x1xf32>
      %29 = math.rsqrt %28 : vector<16x1xf32>
      %30 = vector.broadcast %29 : vector<16x1xf32> to vector<16x128xf32>
      %31 = arith.mulf %21, %30 : vector<16x128xf32>
      %32 = arith.truncf %31 : vector<16x128xf32> to vector<16x128xbf16>
      %c0_16 = arith.constant 0 : index
      %c0_17 = arith.constant 0 : index
      %33 = vector.load %arg6[%c0_16, %c0_17] : memref<16x128xbf16, #tpu.memory_space<vmem>>, vector<16x128xbf16>
      tpu.vector_store %arg6[%c0_16, %c0_17], %32 {strides = array<i32>} : memref<16x128xbf16, #tpu.memory_space<vmem>>, vector<16x128xbf16>,
    } else {
    }
    %c0 = arith.constant 0 : index
    %c0_1 = arith.constant 0 : index
    %3 = vector.load %arg6[%c0, %c0_1] : memref<16x128xbf16, #tpu.memory_space<vmem>>, vector<16x128xbf16>
    %c0_2 = arith.constant 0 : index
    %c0_3 = arith.constant 0 : index
    %4 = vector.load %arg3[%c0_2, %c0_3] : memref<128x128xbf16, #tpu.memory_space<vmem>>, vector<128x128xbf16>
    %cst = arith.constant dense<0.000000e+00> : vector<16x128xf32>
    %5 = tpu.matmul %3, %4, %cst {dimension_numbers = #tpu.dot_dimension_numbers<[1], [0], [0], [1], [0, 0, 1, 1], [], []>} : vector<16x128xbf16>, vector<128x128xbf16>, vector<16x128xf32> -> vector<16x128xf32>
    %c0_4 = arith.constant 0 : index
    %c0_5 = arith.constant 0 : index
    %6 = vector.load %arg4[%c0_4, %c0_5] : memref<1x128xf32, #tpu.memory_space<vmem>>, vector<1x128xf32>
    %7 = vector.broadcast %6 : vector<1x128xf32> to vector<16x128xf32>
    %8 = arith.addf %5, %7 : vector<16x128xf32>
    %c0_6 = arith.constant 0 : index
    %c0_7 = arith.constant 0 : index
    %9 = vector.load %arg5[%c0_6, %c0_7] : memref<16x128xf32, #tpu.memory_space<vmem>>, vector<16x128xf32>
    tpu.vector_store %arg5[%c0_6, %c0_7], %8 {strides = array<i32>} : memref<16x128xf32, #tpu.memory_space<vmem>>, vector<16x128xf32>,
    return
  }
  func.func @transform_0(%arg0: i32, %arg1: i32) -> (i32, i32) {
    %c0_i32 = arith.constant 0 : i32
    %c0_i32_0 = arith.constant 0 : i32
    return %arg0, %c0_i32 : i32, i32
  }
  func.func @transform_1(%arg0: i32, %arg1: i32) -> (i32, i32) {
    %c0_i32 = arith.constant 0 : i32
    %c0_i32_0 = arith.constant 0 : i32
    return %c0_i32, %arg1 : i32, i32
  }
  func.func @transform_2(%arg0: i32, %arg1: i32) -> (i32, i32) {
    %c0_i32 = arith.constant 0 : i32
    %c0_i32_0 = arith.constant 0 : i32
    return %c0_i32, %arg1 : i32, i32
  }
  func.func @transform_3(%arg0: i32, %arg1: i32) -> (i32, i32) {
    %c0_i32 = arith.constant 0 : i32
    return %arg0, %arg1 : i32, i32
  }
}

module attributes {stable_mosaic.version = 11 : i64} {
  func.func @prenorm_linear_kernel(%arg0: i32, %arg1: i32, %arg2: memref<16x128xf32, #tpu.memory_space<vmem>>, %arg3: memref<128x128xbf16, #tpu.memory_space<vmem>>, %arg4: memref<1x128xf32, #tpu.memory_space<vmem>>, %arg5: memref<16x128xf32, #tpu.memory_space<vmem>>, %arg6: memref<16x128xbf16, #tpu.memory_space<vmem>>) attributes {dimension_semantics = [#tpu.dimension_semantics<parallel>, #tpu.dimension_semantics<arbitrary>], iteration_bounds = array<i64: 1, 1>, scalar_prefetch = 0 : i64, scratch_operands = 1 : i64, tpu.core_type = #tpu.core_type<tc>, window_params = [{transform_indices = @transform_0, window_bounds = array<i64: 16, 128>}, {transform_indices = @transform_1, window_bounds = array<i64: 128, 128>}, {transform_indices = @transform_2, window_bounds = array<i64: 1, 128>}, {transform_indices = @transform_3, window_bounds = array<i64: 16, 128>}]} {
    %c0_i32 = arith.constant 0 : i32
    %0 = arith.cmpi eq, %arg1, %c0_i32 : i32
    %1 = arith.extui %0 : i1 to i32
    %c0_i32_0 = arith.constant 0 : i32
    %2 = arith.cmpi ne, %1, %c0_i32_0 : i32
    scf.if %2 {
      %c0_8 = arith.constant 0 : index
      %c0_9 = arith.constant 0 : index
      %10 = vector.load %arg2[%c0_8, %c0_9] : memref<16x128xf32, #tpu.memory_space<vmem>>, vector<16x128xf32>
      %cst_10 = arith.constant dense<0.000000e+00> : vector<16xf32>
      %11 = vector.multi_reduction <add>, %10, %cst_10 [1] : vector<16x128xf32> to vector<16xf32>
      %12 = vector.shape_cast %11 : vector<16xf32> to vector<16x1xf32>
      %cst_11 = arith.constant 3.125000e-02 : f32
      %13 = vector.broadcast %cst_11 : f32 to vector<16x1xf32>
      %14 = arith.mulf %12, %13 : vector<16x1xf32>
      %15 = vector.broadcast %14 : vector<16x1xf32> to vector<16x128xf32>
      %16 = arith.subf %10, %15 : vector<16x128xf32>
      %17 = tpu.iota {dimensions = array<i32: 1>} : vector<16x128xi32>
      %c32_i32 = arith.constant 32 : i32
      %18 = vector.broadcast %c32_i32 : i32 to vector<16x128xi32>
      %19 = arith.cmpi slt, %17, %18 : vector<16x128xi32>
      %cst_12 = arith.constant 0.000000e+00 : f32
      %20 = vector.broadcast %cst_12 : f32 to vector<16x128xf32>
      %21 = arith.select %19, %16, %20 : vector<16x128xi1>, vector<16x128xf32>
      %22 = arith.mulf %21, %21 : vector<16x128xf32>
      %cst_13 = arith.constant dense<0.000000e+00> : vector<16xf32>
      %23 = vector.multi_reduction <add>, %22, %cst_13 [1] : vector<16x128xf32> to vector<16xf32>
      %24 = vector.shape_cast %23 : vector<16xf32> to vector<16x1xf32>
      %cst_14 = arith.constant 3.125000e-02 : f32
      %25 = vector.broadcast %cst_14 : f32 to vector<16x1xf32>
      %26 = arith.mulf %24, %25 : vector<16x1xf32>
      %cst_15 = arith.constant 9.99999974E-6 : f32
      %27 = vector.broadcast %cst_15 : f32 to vector<16x1xf32>
      %28 = arith.addf %26, %27 : vector<16x1xf32>
      %29 = math.rsqrt %28 : vector<16x1xf32>
      %30 = vector.broadcast %29 : vector<16x1xf32> to vector<16x128xf32>
      %31 = arith.mulf %21, %30 : vector<16x128xf32>
      %32 = arith.truncf %31 : vector<16x128xf32> to vector<16x128xbf16>
      %c0_16 = arith.constant 0 : index
      %c0_17 = arith.constant 0 : index
      %33 = vector.load %arg6[%c0_16, %c0_17] : memref<16x128xbf16, #tpu.memory_space<vmem>>, vector<16x128xbf16>
      tpu.vector_store %arg6[%c0_16, %c0_17], %32 {strides = array<i32>} : memref<16x128xbf16, #tpu.memory_space<vmem>>, vector<16x128xbf16>,
    } else {
    }
    %c0 = arith.constant 0 : index
    %c0_1 = arith.constant 0 : index
    %3 = vector.load %arg6[%c0, %c0_1] : memref<16x128xbf16, #tpu.memory_space<vmem>>, vector<16x128xbf16>
    %c0_2 = arith.constant 0 : index
    %c0_3 = arith.constant 0 : index
    %4 = vector.load %arg3[%c0_2, %c0_3] : memref<128x128xbf16, #tpu.memory_space<vmem>>, vector<128x128xbf16>
    %cst = arith.constant dense<0.000000e+00> : vector<16x128xf32>
    %5 = tpu.matmul %3, %4, %cst {dimension_numbers = #tpu.dot_dimension_numbers<[1], [0], [0], [1], [0, 0, 1, 1], [], []>} : vector<16x128xbf16>, vector<128x128xbf16>, vector<16x128xf32> -> vector<16x128xf32>
    %c0_4 = arith.constant 0 : index
    %c0_5 = arith.constant 0 : index
    %6 = vector.load %arg4[%c0_4, %c0_5] : memref<1x128xf32, #tpu.memory_space<vmem>>, vector<1x128xf32>
    %7 = vector.broadcast %6 : vector<1x128xf32> to vector<16x128xf32>
    %8 = arith.addf %5, %7 : vector<16x128xf32>
    %c0_6 = arith.constant 0 : index
    %c0_7 = arith.constant 0 : index
    %9 = vector.load %arg5[%c0_6, %c0_7] : memref<16x128xf32, #tpu.memory_space<vmem>>, vector<16x128xf32>
    tpu.vector_store %arg5[%c0_6, %c0_7], %8 {strides = array<i32>} : memref<16x128xf32, #tpu.memory_space<vmem>>, vector<16x128xf32>,
    return
  }
  func.func @transform_0(%arg0: i32, %arg1: i32) -> (i32, i32) {
    %c0_i32 = arith.constant 0 : i32
    %c0_i32_0 = arith.constant 0 : i32
    return %arg0, %c0_i32 : i32, i32
  }
  func.func @transform_1(%arg0: i32, %arg1: i32) -> (i32, i32) {
    %c0_i32 = arith.constant 0 : i32
    %c0_i32_0 = arith.constant 0 : i32
    return %c0_i32, %arg1 : i32, i32
  }
  func.func @transform_2(%arg0: i32, %arg1: i32) -> (i32, i32) {
    %c0_i32 = arith.constant 0 : i32
    %c0_i32_0 = arith.constant 0 : i32
    return %c0_i32, %arg1 : i32, i32
  }
  func.func @transform_3(%arg0: i32, %arg1: i32) -> (i32, i32) {
    %c0_i32 = arith.constant 0 : i32
    return %arg0, %arg1 : i32, i32
  }
}

</mosaic_0001>

<llo_original>
// kernel: tpu_custom_call.1
$region0: #{tpu_custom_call.1}
  #allocation0 [shape = 'u32[]', space=smem, size = 0x4, offset = 0x4, fixed_abs, tag = 'smem constant byte address 0x4 - core index']
  #allocation1 [shape = 'u32[144,128]{1,0:T(1,128)}', space=vmem, size = 0x12000, scoped, tag = 'internal scratch']
  #allocation2 [shape = 'bf16[16,128]{1,0:T(16,128)(2,1)}', space=vmem, size = 0x1000, scoped, tag = 'scratch operand']
  %s0 = inlined_call_operand.hbm [shape: f32[16,128], index: 0, kind: input, shape index: {}]
  %s1 = inlined_call_operand.hbm [shape: bf16[128,128], index: 1, kind: input, shape index: {}]
  %s2 = inlined_call_operand.vmem [shape: f32[1,128], index: 2, kind: input, shape index: {}]
  %s3 = inlined_call_operand.hbm [shape: f32[16,128], index: 3, kind: output, shape index: {}]
  %s4 = sld [smem:[#allocation0]]
  $region34: #{tpu_custom_call.1} parent=0
    _
  %s6 = ssub.s32 1, %s4
  %s7 = scalar_select 0, %s6, %s4
  $region1: #{tpu_custom_call.1} parent=0
    #allocation3 [shape = 'u8[8192]{0}', space=vmem, size = 0x2000, scoped, tag = 'input window, operand 0, single buffered']
    #allocation4 [shape = 's32[1]{0}', space=sflag, size = 0x4, scoped, tag = 'scoped memory for tpu_custom_call.1']
    #allocation5 [shape = 's32[1]{0}', space=sflag, size = 0x4, scoped, tag = 'scoped memory for tpu_custom_call.1']
    #allocation6 [shape = 'u8[32768]{0}', space=vmem, size = 0x8000, scoped, tag = 'input window, operand 1, single buffered']
    #allocation7 [shape = 's32[1]{0}', space=sflag, size = 0x4, scoped, tag = 'scoped memory for tpu_custom_call.1']
    #allocation8 [shape = 'u8[8192]{0}', space=vmem, size = 0x2000, scoped, tag = 'output window, operand 0, single buffered']
    %8 = vsyncpa [#allocation4], 0
    %9 = vsyncpa [#allocation7], 0
    %10 = vsyncpa [#allocation5], 0
    // Predicated region
    $region2: #{tpu_custom_call.1} parent=1 // pred_check
      _
    $region3: #{tpu_custom_call.1} parent=1 // pred_check_branch
      %12 = sbr.rel (0) target = $region5
    $region4: #{tpu_custom_call.1} parent=1 // pred_region
      %s14 = ssub.s32 256, 256
      %15 = vsyncadd [#allocation4], %s14
      %s16 = sshll.u32 [#allocation3], 4
      %s17 = int_to_ptr.vmem [resolvable:$true] %s16
      %22 = dma.hbm_to_vmem [thread:$0]  %s0, 256, %s17, [#allocation4], 128, 128, 8
    $region5: #{tpu_custom_call.1} parent=1 // pred_fallthru
      _
    // Predicated region
    $region6: #{tpu_custom_call.1} parent=1 // pred_check
      _
    $region7: #{tpu_custom_call.1} parent=1 // pred_check_branch
      %24 = sbr.rel (0) target = $region9
    $region8: #{tpu_custom_call.1} parent=1 // pred_region
      %s26 = ssub.s32 1024, 1024
      %27 = vsyncadd [#allocation7], %s26
      %s28 = sshll.u32 [#allocation6], 4
      %s29 = int_to_ptr.vmem [resolvable:$true] %s28
      %34 = dma.hbm_to_vmem [thread:$0]  %s1, 1024, %s29, [#allocation7], 64, 64, 4
    $region9: #{tpu_custom_call.1} parent=1 // pred_fallthru
      _
    // Predicated region
    $region10: #{tpu_custom_call.1} parent=1 // pred_check
      _
    $region11: #{tpu_custom_call.1} parent=1 // pred_check_branch
      %36 = sbr.rel (0) target = $region13
    $region12: #{tpu_custom_call.1} parent=1 // pred_region
      _
    $region13: #{tpu_custom_call.1} parent=1 // pred_fallthru
      _
    // Predicated region
    $region14: #{tpu_custom_call.1} parent=1 // pred_check
      _
    $region15: #{tpu_custom_call.1} parent=1 // pred_check_branch
      %38 = sbr.rel (0) target = $region17
    $region16: #{tpu_custom_call.1} parent=1 // pred_region
      %39 = dma.done [#allocation4], 256
    $region17: #{tpu_custom_call.1} parent=1 // pred_fallthru
      _
    // Predicated region
    $region18: #{tpu_custom_call.1} parent=1 // pred_check
      _
    $region19: #{tpu_custom_call.1} parent=1 // pred_check_branch
      %41 = sbr.rel (0) target = $region21
    $region20: #{tpu_custom_call.1} parent=1 // pred_region
      %42 = dma.done [#allocation7], 1024
    $region21: #{tpu_custom_call.1} parent=1 // pred_fallthru
      _
    %p44 = scmp.eq.s32.totalorder 0, 0
    // Predicated region
    $region22: #{tpu_custom_call.1} parent=1 // pred_check
      %p45 = pneg %p44
    $region23: #{tpu_custom_call.1} parent=1 // pred_check_branch
      %47 = sbr.rel (%p45) target = $region25
    $region24: #{tpu_custom_call.1} parent=1 // pred_region
      %v48 = vld [vmem:[#allocation3] sm:$0xff]
      %v49 = vld [vmem:[#allocation3 + $0x8] sm:$0xff]
      %50 = vadd.xlane.f32.xlu0 %v48
      %v51 = vpop.xlane.xlu0 %50
      %52 = vadd.xlane.f32.xlu0 %v49
      %v53 = vpop.xlane.xlu0 %52
      %v54 = vmul.f32 %v51, 0.03125
      %v55 = vmul.f32 %v53, 0.03125
      %v56 = vsub.f32 %v48, %v54
      %v57 = vsub.f32 %v49, %v55
      %v58 = vlaneseq
      %v59 = vand.u32 %v58, 127
      %vm60 = vcmp.lt.s32.totalorder %v59, 32
      %v61 = vsel %vm60, %v56, 0.0
      %v62 = vsel %vm60, %v57, 0.0
      %v63 = vmul.f32 %v61, %v61
      %v64 = vmul.f32 %v62, %v62
      %65 = vadd.xlane.f32.xlu0 %v63
      %v66 = vpop.xlane.xlu0 %65
      %67 = vadd.xlane.f32.xlu0 %v64
      %v68 = vpop.xlane.xlu0 %67
      %v69 = vmul.f32 %v66, 0.03125
      %v70 = vmul.f32 %v68, 0.03125
      %v71 = vadd.f32 %v69, 1e-05
      %v72 = vadd.f32 %v70, 1e-05
      %v73 = vrsqrt.pop %v71
      %v74 = vrsqrt.pop %v72
      %v75 = vmul.f32 %v61, %v73
      %v76 = vmul.f32 %v62, %v74
      %v77 = vpack.c.bf16 %v76, %v75
      %78 = vst [vmem:[#allocation2] sm:$0xff] %v77
    $region25: #{tpu_custom_call.1} parent=1 // pred_fallthru
      _
    %v79 = vld [vmem:[#allocation2] sm:$0xff]
    %v80 = vld [vmem:[#allocation6] sm:$0xf]
    %v81 = vld [vmem:[#allocation6 + $0x4] sm:$0xf]
    %v82 = vld [vmem:[#allocation6 + $0x8] sm:$0xf]
    %v83 = vld [vmem:[#allocation6 + $0xc] sm:$0xf]
    %v84 = vld [vmem:[#allocation6 + $0x10] sm:$0xf]
    %v85 = vld [vmem:[#allocation6 + $0x14] sm:$0xf]
    %v86 = vld [vmem:[#allocation6 + $0x18] sm:$0xf]
    %v87 = vld [vmem:[#allocation6 + $0x1c] sm:$0xf]
    %v88 = vld [vmem:[#allocation6 + $0x20] sm:$0xf]
    %v89 = vld [vmem:[#allocation6 + $0x24] sm:$0xf]
    %v90 = vld [vmem:[#allocation6 + $0x28] sm:$0xf]
    %v91 = vld [vmem:[#allocation6 + $0x2c] sm:$0xf]
    %v92 = vld [vmem:[#allocation6 + $0x30] sm:$0xf]
    %v93 = vld [vmem:[#allocation6 + $0x34] sm:$0xf]
    %v94 = vld [vmem:[#allocation6 + $0x38] sm:$0xf]
    %v95 = vld [vmem:[#allocation6 + $0x3c] sm:$0xf]
    %v96 = vld [vmem:[%s2] sm:$0x1]
    %v98 = vlaneseq
    %v99 = vshrl.u32 %v98, 7
    %v100 = vsub.s32 0, %v99
    %v101 = vrot.slane %v96, %v100
    %v119 = vunpack.c.l.b16 %v80
    %v120 = vunpack.c.l.b16 %v81
    %v121 = vunpack.c.l.b16 %v82
    %v122 = vunpack.c.l.b16 %v83
    %v123 = vunpack.c.l.b16 %v84
    %v124 = vunpack.c.l.b16 %v85
    %v125 = vunpack.c.l.b16 %v86
    %v126 = vunpack.c.l.b16 %v87
    %v127 = vunpack.c.l.b16 %v88
    %v128 = vunpack.c.l.b16 %v89
    %v129 = vunpack.c.l.b16 %v90
    %v130 = vunpack.c.l.b16 %v91
    %v131 = vunpack.c.l.b16 %v92
    %v132 = vunpack.c.l.b16 %v93
    %v133 = vunpack.c.l.b16 %v94
    %v134 = vunpack.c.l.b16 %v95
    %v135 = vpack.c.b16 %v120, %v119
    %v136 = vpack.c.b16 %v122, %v121
    %v137 = vpack.c.b16 %v124, %v123
    %v138 = vpack.c.b16 %v126, %v125
    %v139 = vpack.c.b16 %v128, %v127
    %v140 = vpack.c.b16 %v130, %v129
    %v141 = vpack.c.b16 %v132, %v131
    %v142 = vpack.c.b16 %v134, %v133
    %151 = vmatprep.subr.bf16.mxu0 0
    %152 = vmatpush1.bf16.msra.mxu0 %v135
    %153 = vmatprep.subr.bf16.mxu0 0
    %154 = vmatpush1.bf16.msra.mxu0 %v136
    %155 = vmatprep.subr.bf16.mxu0 0
    %156 = vmatpush1.bf16.msra.mxu0 %v137
    %157 = vmatprep.subr.bf16.mxu0 0
    %158 = vmatpush1.bf16.msra.mxu0 %v138
    %159 = vmatprep.subr.bf16.mxu0 0
    %160 = vmatpush1.bf16.msra.mxu0 %v139
    %161 = vmatprep.subr.bf16.mxu0 0
    %162 = vmatpush1.bf16.msra.mxu0 %v140
    %163 = vmatprep.subr.bf16.mxu0 0
    %164 = vmatpush1.bf16.msra.mxu0 %v141
    %165 = vmatprep.subr.bf16.mxu0 0
    %166 = vmatpush1.bf16.msra.mxu0 %v142
    %167 = vmatprep.subr.bf16.mxu0 0
    %168 = vmatpush1.bf16.msra.mxu0 0
    %169 = vmatprep.subr.bf16.mxu0 0
    %170 = vmatpush1.bf16.msra.mxu0 0
    %171 = vmatprep.subr.bf16.mxu0 0
    %172 = vmatpush1.bf16.msra.mxu0 0
    %173 = vmatprep.subr.bf16.mxu0 0
    %174 = vmatpush1.bf16.msra.mxu0 0
    %175 = vmatprep.subr.bf16.mxu0 0
    %176 = vmatpush1.bf16.msra.mxu0 0
    %177 = vmatprep.subr.bf16.mxu0 0
    %178 = vmatpush1.bf16.msra.mxu0 0
    %179 = vmatprep.subr.bf16.mxu0 0
    %180 = vmatpush1.bf16.msra.mxu0 0
    %181 = vmatprep.subr.bf16.mxu0 0
    %182 = vmatpush1.bf16.msra.mxu0 0
    %183 = vmatprep.mubr.bf16.mxu0 0
    %184 = vmatmul.mubr.bf16.gmra.mrb[0].mxu0 %v79
    %v185 = vpop.f32.mrb[0].mxu0
    %v186 = vadd.f32 %v101, %v185
    %v187 = vpop.f32.mrb[0].mxu0
    %v188 = vpop.f32.mrb[0].mxu0
    %v189 = vadd.f32 %v101, %v188
    %v190 = vpop.f32.mrb[0].mxu0
    %191 = vdwg.mxu0
    %192 = vst [vmem:[#allocation8] sm:$0xff] %v186
    %193 = vst [vmem:[#allocation8 + $0x8] sm:$0xff] %v189
    // Predicated region
    $region26: #{tpu_custom_call.1} parent=1 // pred_check
      _
    $region27: #{tpu_custom_call.1} parent=1 // pred_check_branch
      %195 = sbr.rel (0) target = $region29
    $region28: #{tpu_custom_call.1} parent=1 // pred_region
      %s197 = ssub.s32 256, 256
      %198 = vsyncadd [#allocation5], %s197
      %s199 = sshll.u32 [#allocation8], 4
      %s200 = int_to_ptr.vmem [resolvable:$true] %s199
      %205 = dma.vmem_to_hbm [thread:$0]  %s200, 256, %s3, [#allocation5], 128, 128, 8
    $region29: #{tpu_custom_call.1} parent=1 // pred_fallthru
      _
    // Predicated region
    $region30: #{tpu_custom_call.1} parent=1 // pred_check
      _
    $region31: #{tpu_custom_call.1} parent=1 // pred_check_branch
      %207 = sbr.rel (0) target = $region33
    $region32: #{tpu_custom_call.1} parent=1 // pred_region
      %208 = dma.done [#allocation5], 256
    $region33: #{tpu_custom_call.1} parent=1 // pred_fallthru
      _
    %209 = vsyncpa [#allocation4], 1
    %210 = vsyncpa [#allocation7], 1
    %211 = vsyncpa [#allocation5], 1

// kernel: tpu_custom_call.1
$region0: #{tpu_custom_call.1}
  #allocation0 [shape = 'u32[]', space=smem, size = 0x4, offset = 0x4, fixed_abs, tag = 'smem constant byte address 0x4 - core index']
  #allocation1 [shape = 'u32[144,128]{1,0:T(1,128)}', space=vmem, size = 0x12000, scoped, tag = 'internal scratch']
  #allocation2 [shape = 'bf16[16,128]{1,0:T(16,128)(2,1)}', space=vmem, size = 0x1000, scoped, tag = 'scratch operand']
  %s0 = inlined_call_operand.hbm [shape: f32[16,128], index: 0, kind: input, shape index: {}]
  %s1 = inlined_call_operand.hbm [shape: bf16[128,128], index: 1, kind: input, shape index: {}]
  %s2 = inlined_call_operand.vmem [shape: f32[1,128], index: 2, kind: input, shape index: {}]
  %s3 = inlined_call_operand.hbm [shape: f32[16,128], index: 3, kind: output, shape index: {}]
  %s4 = sld [smem:[#allocation0]]
  $region34: #{tpu_custom_call.1} parent=0
    _
  %s6 = ssub.s32 1, %s4
  %s7 = scalar_select 0, %s6, %s4
  $region1: #{tpu_custom_call.1} parent=0
    #allocation3 [shape = 'u8[8192]{0}', space=vmem, size = 0x2000, scoped, tag = 'input window, operand 0, single buffered']
    #allocation4 [shape = 's32[1]{0}', space=sflag, size = 0x4, scoped, tag = 'scoped memory for tpu_custom_call.1']
    #allocation5 [shape = 's32[1]{0}', space=sflag, size = 0x4, scoped, tag = 'scoped memory for tpu_custom_call.1']
    #allocation6 [shape = 'u8[32768]{0}', space=vmem, size = 0x8000, scoped, tag = 'input window, operand 1, single buffered']
    #allocation7 [shape = 's32[1]{0}', space=sflag, size = 0x4, scoped, tag = 'scoped memory for tpu_custom_call.1']
    #allocation8 [shape = 'u8[8192]{0}', space=vmem, size = 0x2000, scoped, tag = 'output window, operand 0, single buffered']
    %8 = vsyncpa [#allocation4], 0
    %9 = vsyncpa [#allocation7], 0
    %10 = vsyncpa [#allocation5], 0
    // Predicated region
    $region2: #{tpu_custom_call.1} parent=1 // pred_check
      _
    $region3: #{tpu_custom_call.1} parent=1 // pred_check_branch
      %12 = sbr.rel (0) target = $region5
    $region4: #{tpu_custom_call.1} parent=1 // pred_region
      %s14 = ssub.s32 256, 256
      %15 = vsyncadd [#allocation4], %s14
      %s16 = sshll.u32 [#allocation3], 4
      %s17 = int_to_ptr.vmem [resolvable:$true] %s16
      %22 = dma.hbm_to_vmem [thread:$0]  %s0, 256, %s17, [#allocation4], 128, 128, 8
    $region5: #{tpu_custom_call.1} parent=1 // pred_fallthru
      _
    // Predicated region
    $region6: #{tpu_custom_call.1} parent=1 // pred_check
      _
    $region7: #{tpu_custom_call.1} parent=1 // pred_check_branch
      %24 = sbr.rel (0) target = $region9
    $region8: #{tpu_custom_call.1} parent=1 // pred_region
      %s26 = ssub.s32 1024, 1024
      %27 = vsyncadd [#allocation7], %s26
      %s28 = sshll.u32 [#allocation6], 4
      %s29 = int_to_ptr.vmem [resolvable:$true] %s28
      %34 = dma.hbm_to_vmem [thread:$0]  %s1, 1024, %s29, [#allocation7], 64, 64, 4
    $region9: #{tpu_custom_call.1} parent=1 // pred_fallthru
      _
    // Predicated region
    $region10: #{tpu_custom_call.1} parent=1 // pred_check
      _
    $region11: #{tpu_custom_call.1} parent=1 // pred_check_branch
      %36 = sbr.rel (0) target = $region13
    $region12: #{tpu_custom_call.1} parent=1 // pred_region
      _
    $region13: #{tpu_custom_call.1} parent=1 // pred_fallthru
      _
    // Predicated region
    $region14: #{tpu_custom_call.1} parent=1 // pred_check
      _
    $region15: #{tpu_custom_call.1} parent=1 // pred_check_branch
      %38 = sbr.rel (0) target = $region17
    $region16: #{tpu_custom_call.1} parent=1 // pred_region
      %39 = dma.done [#allocation4], 256
    $region17: #{tpu_custom_call.1} parent=1 // pred_fallthru
      _
    // Predicated region
    $region18: #{tpu_custom_call.1} parent=1 // pred_check
      _
    $region19: #{tpu_custom_call.1} parent=1 // pred_check_branch
      %41 = sbr.rel (0) target = $region21
    $region20: #{tpu_custom_call.1} parent=1 // pred_region
      %42 = dma.done [#allocation7], 1024
    $region21: #{tpu_custom_call.1} parent=1 // pred_fallthru
      _
    %p44 = scmp.eq.s32.totalorder 0, 0
    // Predicated region
    $region22: #{tpu_custom_call.1} parent=1 // pred_check
      %p45 = pneg %p44
    $region23: #{tpu_custom_call.1} parent=1 // pred_check_branch
      %47 = sbr.rel (%p45) target = $region25
    $region24: #{tpu_custom_call.1} parent=1 // pred_region
      %v48 = vld [vmem:[#allocation3] sm:$0xff]
      %v49 = vld [vmem:[#allocation3 + $0x8] sm:$0xff]
      %50 = vadd.xlane.f32.xlu0 %v48
      %v51 = vpop.xlane.xlu0 %50
      %52 = vadd.xlane.f32.xlu0 %v49
      %v53 = vpop.xlane.xlu0 %52
      %v54 = vmul.f32 %v51, 0.03125
      %v55 = vmul.f32 %v53, 0.03125
      %v56 = vsub.f32 %v48, %v54
      %v57 = vsub.f32 %v49, %v55
      %v58 = vlaneseq
      %v59 = vand.u32 %v58, 127
      %vm60 = vcmp.lt.s32.totalorder %v59, 32
      %v61 = vsel %vm60, %v56, 0.0
      %v62 = vsel %vm60, %v57, 0.0
      %v63 = vmul.f32 %v61, %v61
      %v64 = vmul.f32 %v62, %v62
      %65 = vadd.xlane.f32.xlu0 %v63
      %v66 = vpop.xlane.xlu0 %65
      %67 = vadd.xlane.f32.xlu0 %v64
      %v68 = vpop.xlane.xlu0 %67
      %v69 = vmul.f32 %v66, 0.03125
      %v70 = vmul.f32 %v68, 0.03125
      %v71 = vadd.f32 %v69, 1e-05
      %v72 = vadd.f32 %v70, 1e-05
      %v73 = vrsqrt.pop %v71
      %v74 = vrsqrt.pop %v72
      %v75 = vmul.f32 %v61, %v73
      %v76 = vmul.f32 %v62, %v74
      %v77 = vpack.c.bf16 %v76, %v75
      %78 = vst [vmem:[#allocation2] sm:$0xff] %v77
    $region25: #{tpu_custom_call.1} parent=1 // pred_fallthru
      _
    %v79 = vld [vmem:[#allocation2] sm:$0xff]
    %v80 = vld [vmem:[#allocation6] sm:$0xf]
    %v81 = vld [vmem:[#allocation6 + $0x4] sm:$0xf]
    %v82 = vld [vmem:[#allocation6 + $0x8] sm:$0xf]
    %v83 = vld [vmem:[#allocation6 + $0xc] sm:$0xf]
    %v84 = vld [vmem:[#allocation6 + $0x10] sm:$0xf]
    %v85 = vld [vmem:[#allocation6 + $0x14] sm:$0xf]
    %v86 = vld [vmem:[#allocation6 + $0x18] sm:$0xf]
    %v87 = vld [vmem:[#allocation6 + $0x1c] sm:$0xf]
    %v88 = vld [vmem:[#allocation6 + $0x20] sm:$0xf]
    %v89 = vld [vmem:[#allocation6 + $0x24] sm:$0xf]
    %v90 = vld [vmem:[#allocation6 + $0x28] sm:$0xf]
    %v91 = vld [vmem:[#allocation6 + $0x2c] sm:$0xf]
    %v92 = vld [vmem:[#allocation6 + $0x30] sm:$0xf]
    %v93 = vld [vmem:[#allocation6 + $0x34] sm:$0xf]
    %v94 = vld [vmem:[#allocation6 + $0x38] sm:$0xf]
    %v95 = vld [vmem:[#allocation6 + $0x3c] sm:$0xf]
    %v96 = vld [vmem:[%s2] sm:$0x1]
    %v98 = vlaneseq
    %v99 = vshrl.u32 %v98, 7
    %v100 = vsub.s32 0, %v99
    %v101 = vrot.slane %v96, %v100
    %v119 = vunpack.c.l.b16 %v80
    %v120 = vunpack.c.l.b16 %v81
    %v121 = vunpack.c.l.b16 %v82
    %v122 = vunpack.c.l.b16 %v83
    %v123 = vunpack.c.l.b16 %v84
    %v124 = vunpack.c.l.b16 %v85
    %v125 = vunpack.c.l.b16 %v86
    %v126 = vunpack.c.l.b16 %v87
    %v127 = vunpack.c.l.b16 %v88
    %v128 = vunpack.c.l.b16 %v89
    %v129 = vunpack.c.l.b16 %v90
    %v130 = vunpack.c.l.b16 %v91
    %v131 = vunpack.c.l.b16 %v92
    %v132 = vunpack.c.l.b16 %v93
    %v133 = vunpack.c.l.b16 %v94
    %v134 = vunpack.c.l.b16 %v95
    %v135 = vpack.c.b16 %v120, %v119
    %v136 = vpack.c.b16 %v122, %v121
    %v137 = vpack.c.b16 %v124, %v123
    %v138 = vpack.c.b16 %v126, %v125
    %v139 = vpack.c.b16 %v128, %v127
    %v140 = vpack.c.b16 %v130, %v129
    %v141 = vpack.c.b16 %v132, %v131
    %v142 = vpack.c.b16 %v134, %v133
    %151 = vmatprep.subr.bf16.mxu0 0
    %152 = vmatpush1.bf16.msra.mxu0 %v135
    %153 = vmatprep.subr.bf16.mxu0 0
    %154 = vmatpush1.bf16.msra.mxu0 %v136
    %155 = vmatprep.subr.bf16.mxu0 0
    %156 = vmatpush1.bf16.msra.mxu0 %v137
    %157 = vmatprep.subr.bf16.mxu0 0
    %158 = vmatpush1.bf16.msra.mxu0 %v138
    %159 = vmatprep.subr.bf16.mxu0 0
    %160 = vmatpush1.bf16.msra.mxu0 %v139
    %161 = vmatprep.subr.bf16.mxu0 0
    %162 = vmatpush1.bf16.msra.mxu0 %v140
    %163 = vmatprep.subr.bf16.mxu0 0
    %164 = vmatpush1.bf16.msra.mxu0 %v141
    %165 = vmatprep.subr.bf16.mxu0 0
    %166 = vmatpush1.bf16.msra.mxu0 %v142
    %167 = vmatprep.subr.bf16.mxu0 0
    %168 = vmatpush1.bf16.msra.mxu0 0
    %169 = vmatprep.subr.bf16.mxu0 0
    %170 = vmatpush1.bf16.msra.mxu0 0
    %171 = vmatprep.subr.bf16.mxu0 0
    %172 = vmatpush1.bf16.msra.mxu0 0
    %173 = vmatprep.subr.bf16.mxu0 0
    %174 = vmatpush1.bf16.msra.mxu0 0
    %175 = vmatprep.subr.bf16.mxu0 0
    %176 = vmatpush1.bf16.msra.mxu0 0
    %177 = vmatprep.subr.bf16.mxu0 0
    %178 = vmatpush1.bf16.msra.mxu0 0
    %179 = vmatprep.subr.bf16.mxu0 0
    %180 = vmatpush1.bf16.msra.mxu0 0
    %181 = vmatprep.subr.bf16.mxu0 0
    %182 = vmatpush1.bf16.msra.mxu0 0
    %183 = vmatprep.mubr.bf16.mxu0 0
    %184 = vmatmul.mubr.bf16.gmra.mrb[0].mxu0 %v79
    %v185 = vpop.f32.mrb[0].mxu0
    %v186 = vadd.f32 %v101, %v185
    %v187 = vpop.f32.mrb[0].mxu0
    %v188 = vpop.f32.mrb[0].mxu0
    %v189 = vadd.f32 %v101, %v188
    %v190 = vpop.f32.mrb[0].mxu0
    %191 = vdwg.mxu0
    %192 = vst [vmem:[#allocation8] sm:$0xff] %v186
    %193 = vst [vmem:[#allocation8 + $0x8] sm:$0xff] %v189
    // Predicated region
    $region26: #{tpu_custom_call.1} parent=1 // pred_check
      _
    $region27: #{tpu_custom_call.1} parent=1 // pred_check_branch
      %195 = sbr.rel (0) target = $region29
    $region28: #{tpu_custom_call.1} parent=1 // pred_region
      %s197 = ssub.s32 256, 256
      %198 = vsyncadd [#allocation5], %s197
      %s199 = sshll.u32 [#allocation8], 4
      %s200 = int_to_ptr.vmem [resolvable:$true] %s199
      %205 = dma.vmem_to_hbm [thread:$0]  %s200, 256, %s3, [#allocation5], 128, 128, 8
    $region29: #{tpu_custom_call.1} parent=1 // pred_fallthru
      _
    // Predicated region
    $region30: #{tpu_custom_call.1} parent=1 // pred_check
      _
    $region31: #{tpu_custom_call.1} parent=1 // pred_check_branch
      %207 = sbr.rel (0) target = $region33
    $region32: #{tpu_custom_call.1} parent=1 // pred_region
      %208 = dma.done [#allocation5], 256
    $region33: #{tpu_custom_call.1} parent=1 // pred_fallthru
      _
    %209 = vsyncpa [#allocation4], 1
    %210 = vsyncpa [#allocation7], 1
    %211 = vsyncpa [#allocation5], 1

</llo_original>
